<compile_context>
chip_gen: v7x
topology: tpu7x:2x2x1
jax: 0.10.0
libtpu: 0.0.40
codegen_flags: <defaults>
</compile_context>

<pallas_src>
import jax
import jax.numpy as jnp
from jax.experimental import pallas as pl
from jax.experimental.pallas import tpu as pltpu


LANE = 128


def _ru(n, m):
    """Round n up to a multiple of m."""
    return ((n + m - 1) // m) * m


def actor_kernel(state_ref, w1_ref, w2_ref, wfc_ref, b_ref, out_ref):
    Hp = w1_ref.shape[1]   # padded hidden dim
    Fp = w2_ref.shape[1]   # padded feature dim
    A = out_ref.shape[1]   # REAL action dim (output block holds real cols only)

    x = state_ref[...]                                              # (TB, S) f32

    # head layer 1: Linear + ReLU  (bf16 MXU operands, f32 accumulation)
    h = jnp.dot(x.astype(jnp.bfloat16), w1_ref[...],
                preferred_element_type=jnp.float32)
    h = jnp.maximum(h + b_ref[0:1, :Hp], 0.0)                       # (TB, Hp) f32

    # head layer 2: Linear + ReLU
    f = jnp.dot(h.astype(jnp.bfloat16), w2_ref[...],
                preferred_element_type=jnp.float32)
    f = jnp.maximum(f + b_ref[1:2, :Fp], 0.0)                       # (TB, Fp) f32

    # Actor fc + tanh  (torch.tanh(self.fc(a))).
    # Matmul uses the lane-padded weight (MXU emits 128 lanes anyway); only the
    # A real columns are bias-added, tanh'd and stored.
    a = jnp.dot(f.astype(jnp.bfloat16), wfc_ref[...],
                preferred_element_type=jnp.float32)                 # (TB, Ap) f32
    out_ref[...] = jnp.tanh(a[:, :A] + b_ref[2:3, :A])              # (TB, A)  f32


def pack_params(params):
    """Pad lane dims to multiples of 128, cast weights to bf16, fuse biases."""
    w1, b1, w2, b2, wfc, bfc = params
    S, H = w1.shape
    _, F = w2.shape
    _, A = wfc.shape
    Hp, Fp, Ap = _ru(H, LANE), _ru(F, LANE), _ru(A, LANE)

    def pad2(x, rows, cols):
        r, c = x.shape
        return jnp.pad(x, ((0, rows - r), (0, cols - c)))

    w1p = pad2(w1, S, Hp).astype(jnp.bfloat16)      # (S,  Hp)
    w2p = pad2(w2, Hp, Fp).astype(jnp.bfloat16)     # (Hp, Fp)  zero rows/cols are inert
    wfcp = pad2(wfc, Fp, Ap).astype(jnp.bfloat16)   # (Fp, Ap)

    L = max(Hp, Fp, Ap)
    b = jnp.zeros((3, L), jnp.float32)
    b = b.at[0, :H].set(b1.reshape(-1))
    b = b.at[1, :F].set(b2.reshape(-1))
    b = b.at[2, :A].set(bfc.reshape(-1))
    return (w1p, w2p, wfcp, b), (S, H, F, A)


def actor_forward(state, packed, dims, *, block_b=2048):
    """Fused Actor forward on TPU. Returns (B, action_dim) f32."""
    w1p, w2p, wfcp, b = packed
    S, H, F, A = dims
    Hp, Fp, Ap = w1p.shape[1], w2p.shape[1], wfcp.shape[1]

    B = state.shape[0]
    # Grid shaping: >= 2 tiles when B >= 16 (use both v7x TCs), tiles sized to
    # (nearly) divide B so the state pad below is usually a no-op.
    min_tiles = 2 if B >= 16 else 1
    n_tiles = max(pl.cdiv(B, block_b), min_tiles)
    TB = _ru(pl.cdiv(B, n_tiles), 8)          # batch tile (multiple of 8 sublanes)
    B_pad = _ru(B, TB)
    if B_pad != B:
        state = jnp.pad(state, ((0, B_pad - B), (0, 0)))
    grid = (B_pad // TB,)

    state_spec = pl.BlockSpec((TB, S), lambda i: (i, 0), memory_space=pltpu.VMEM)
    resident = lambda arr: pl.BlockSpec(arr.shape, lambda i: (0, 0),
                                        memory_space=pltpu.VMEM)
    out_spec = pl.BlockSpec((TB, A), lambda i: (i, 0), memory_space=pltpu.VMEM)

    cost = pl.CostEstimate(
        flops=2 * B_pad * (S * Hp + Hp * Fp + Fp * Ap),
        transcendentals=B_pad * A,
        bytes_accessed=(B_pad * S * 4 + B_pad * A * 4
                        + w1p.size * 2 + w2p.size * 2 + wfcp.size * 2
                        + b.size * 4),
    )

    out = pl.pallas_call(
        actor_kernel,
        out_shape=jax.ShapeDtypeStruct((B_pad, A), jnp.float32),
        grid=grid,
        in_specs=[state_spec, resident(w1p), resident(w2p), resident(wfcp),
                  resident(b)],
        out_specs=out_spec,
        compiler_params=pltpu.CompilerParams(
            dimension_semantics=("parallel",)),
        cost_estimate=cost,
    )(state, w1p, w2p, wfcp, b)

    return out if B_pad == B else out[:B]


def init_params(key, state_dim, hidden_dim, feature_dim, action_dim):
    """Deterministic synthetic parameters (weights stored as (in, out))."""
    ks = jax.random.split(key, 6)
    scale = 0.1
    w1 = scale * jax.random.normal(ks[0], (state_dim, hidden_dim), jnp.float32)
    b1 = scale * jax.random.normal(ks[1], (1, hidden_dim), jnp.float32)
    w2 = scale * jax.random.normal(ks[2], (hidden_dim, feature_dim), jnp.float32)
    b2 = scale * jax.random.normal(ks[3], (1, feature_dim), jnp.float32)
    wfc = scale * jax.random.normal(ks[4], (feature_dim, action_dim), jnp.float32)
    bfc = scale * jax.random.normal(ks[5], (1, action_dim), jnp.float32)
    return (w1, b1, w2, b2, wfc, bfc)


def actor_reference_f32(state, params):
    """Pure-f32 JAX reference matching the PyTorch semantics."""
    w1, b1, w2, b2, wfc, bfc = params
    a = jnp.maximum(state @ w1 + b1, 0.0)
    a = jnp.maximum(a @ w2 + b2, 0.0)
    return jnp.tanh(a @ wfc + bfc)


def actor_reference_matched(state, packed, dims):
    """Reference using the same bf16-operand / f32-accumulate math as the kernel."""
    w1p, w2p, wfcp, b = packed
    S, H, F, A = dims
    Hp, Fp, Ap = w1p.shape[1], w2p.shape[1], wfcp.shape[1]
    h = jnp.dot(state.astype(jnp.bfloat16), w1p,
                preferred_element_type=jnp.float32)
    h = jnp.maximum(h + b[0:1, :Hp], 0.0)
    f = jnp.dot(h.astype(jnp.bfloat16), w2p,
                preferred_element_type=jnp.float32)
    f = jnp.maximum(f + b[1:2, :Fp], 0.0)
    a = jnp.dot(f.astype(jnp.bfloat16), wfcp,
                preferred_element_type=jnp.float32)
    return jnp.tanh(a[:, :A] + b[2:3, :A])


if __name__ == "__main__":
    # Small shapes consistent with a vector-state TD3 actor.
    batch, state_dim, hidden_dim, feature_dim, action_dim = 8, 32, 128, 64, 8

    key = jax.random.PRNGKey(0)
    k_state, k_params = jax.random.split(key)

    state = jax.random.normal(k_state, (batch, state_dim), jnp.float32)
    params = init_params(k_params, state_dim, hidden_dim, feature_dim, action_dim)
    packed, dims = pack_params(params)

    out = actor_forward(state, packed, dims)
    out = jax.block_until_ready(out)
    assert out.shape == (batch, action_dim)

    # Tight check against a reference doing the identical bf16-in / f32-acc math.
    ref_matched = actor_reference_matched(state, packed, dims)
    assert jnp.allclose(out, ref_matched, atol=1e-5, rtol=1e-5), \
        "mismatch vs matched (bf16) reference"

    # Looser check against the pure-f32 PyTorch-semantics reference
    # (bf16 MXU inputs trade a small amount of precision by design).
    ref_f32 = actor_reference_f32(state, params)
    assert jnp.allclose(out, ref_f32, atol=2e-2, rtol=2e-2), \
        "mismatch vs f32 reference"

    print("KERNEL_OK")
</pallas_src>

<mosaic_0001>
module attributes {stable_mosaic.version = 11 : i64} {
  func.func @actor_kernel(%arg0: i32, %arg1: memref<8x32xf32, #tpu.memory_space<vmem>>, %arg2: memref<32x128xbf16, #tpu.memory_space<vmem>>, %arg3: memref<128x128xbf16, #tpu.memory_space<vmem>>, %arg4: memref<128x128xbf16, #tpu.memory_space<vmem>>, %arg5: memref<3x128xf32, #tpu.memory_space<vmem>>, %arg6: memref<8x8xf32, #tpu.memory_space<vmem>>) attributes {dimension_semantics = [#tpu.dimension_semantics<parallel>], iteration_bounds = array<i64: 1>, scalar_prefetch = 0 : i64, scratch_operands = 0 : i64, tpu.core_type = #tpu.core_type<tc>, window_params = [{transform_indices = @transform_0, window_bounds = array<i64: 8, 32>}, {pipeline_mode = #tpu.pipeline_mode<synchronous>, transform_indices = @transform_1, window_bounds = array<i64: 32, 128>}, {pipeline_mode = #tpu.pipeline_mode<synchronous>, transform_indices = @transform_2, window_bounds = array<i64: 128, 128>}, {pipeline_mode = #tpu.pipeline_mode<synchronous>, transform_indices = @transform_3, window_bounds = array<i64: 128, 128>}, {pipeline_mode = #tpu.pipeline_mode<synchronous>, transform_indices = @transform_4, window_bounds = array<i64: 3, 128>}, {transform_indices = @transform_5, window_bounds = array<i64: 8, 8>}]} {
    %c0 = arith.constant 0 : index
    %c0_0 = arith.constant 0 : index
    %0 = vector.load %arg1[%c0, %c0_0] : memref<8x32xf32, #tpu.memory_space<vmem>>, vector<8x32xf32>
    %1 = arith.truncf %0 : vector<8x32xf32> to vector<8x32xbf16>
    %c0_1 = arith.constant 0 : index
    %c0_2 = arith.constant 0 : index
    %2 = vector.load %arg2[%c0_1, %c0_2] : memref<32x128xbf16, #tpu.memory_space<vmem>>, vector<32x128xbf16>
    %cst = arith.constant dense<0.000000e+00> : vector<8x128xf32>
    %3 = tpu.matmul %1, %2, %cst {dimension_numbers = #tpu.dot_dimension_numbers<[1], [0], [0], [1], [0, 0, 1, 1], [], []>} : vector<8x32xbf16>, vector<32x128xbf16>, vector<8x128xf32> -> vector<8x128xf32>
    %c0_3 = arith.constant 0 : index
    %c0_4 = arith.constant 0 : index
    %4 = vector.load %arg5[%c0_3, %c0_4] : memref<3x128xf32, #tpu.memory_space<vmem>>, vector<1x128xf32>
    %5 = vector.broadcast %4 : vector<1x128xf32> to vector<8x128xf32>
    %6 = arith.addf %3, %5 : vector<8x128xf32>
    %cst_5 = arith.constant 0.000000e+00 : f32
    %7 = vector.broadcast %cst_5 : f32 to vector<8x128xf32>
    %8 = arith.maximumf %6, %7 : vector<8x128xf32>
    %9 = arith.truncf %8 : vector<8x128xf32> to vector<8x128xbf16>
    %c0_6 = arith.constant 0 : index
    %c0_7 = arith.constant 0 : index
    %10 = vector.load %arg3[%c0_6, %c0_7] : memref<128x128xbf16, #tpu.memory_space<vmem>>, vector<128x128xbf16>
    %cst_8 = arith.constant dense<0.000000e+00> : vector<8x128xf32>
    %11 = tpu.matmul %9, %10, %cst_8 {dimension_numbers = #tpu.dot_dimension_numbers<[1], [0], [0], [1], [0, 0, 1, 1], [], []>} : vector<8x128xbf16>, vector<128x128xbf16>, vector<8x128xf32> -> vector<8x128xf32>
    %c1 = arith.constant 1 : index
    %c0_9 = arith.constant 0 : index
    %12 = vector.load %arg5[%c1, %c0_9] : memref<3x128xf32, #tpu.memory_space<vmem>>, vector<1x128xf32>
    %13 = vector.broadcast %12 : vector<1x128xf32> to vector<8x128xf32>
    %14 = arith.addf %11, %13 : vector<8x128xf32>
    %cst_10 = arith.constant 0.000000e+00 : f32
    %15 = vector.broadcast %cst_10 : f32 to vector<8x128xf32>
    %16 = arith.maximumf %14, %15 : vector<8x128xf32>
    %17 = arith.truncf %16 : vector<8x128xf32> to vector<8x128xbf16>
    %c0_11 = arith.constant 0 : index
    %c0_12 = arith.constant 0 : index
    %18 = vector.load %arg4[%c0_11, %c0_12] : memref<128x128xbf16, #tpu.memory_space<vmem>>, vector<128x128xbf16>
    %cst_13 = arith.constant dense<0.000000e+00> : vector<8x128xf32>
    %19 = tpu.matmul %17, %18, %cst_13 {dimension_numbers = #tpu.dot_dimension_numbers<[1], [0], [0], [1], [0, 0, 1, 1], [], []>} : vector<8x128xbf16>, vector<128x128xbf16>, vector<8x128xf32> -> vector<8x128xf32>
    %20 = vector.extract_strided_slice %19 {offsets = [0, 0], sizes = [8, 8], strides = [1, 1]} : vector<8x128xf32> to vector<8x8xf32>
    %c2 = arith.constant 2 : index
    %c0_14 = arith.constant 0 : index
    %21 = vector.load %arg5[%c2, %c0_14] : memref<3x128xf32, #tpu.memory_space<vmem>>, vector<1x8xf32>
    %22 = vector.broadcast %21 : vector<1x8xf32> to vector<8x8xf32>
    %23 = arith.addf %20, %22 : vector<8x8xf32>
    %24 = math.tanh %23 : vector<8x8xf32>
    %c0_15 = arith.constant 0 : index
    %c0_16 = arith.constant 0 : index
    %25 = vector.load %arg6[%c0_15, %c0_16] : memref<8x8xf32, #tpu.memory_space<vmem>>, vector<8x8xf32>
    tpu.vector_store %arg6[%c0_15, %c0_16], %24 {strides = array<i32>} : memref<8x8xf32, #tpu.memory_space<vmem>>, vector<8x8xf32>,
    return
  }
  func.func @transform_0(%arg0: i32) -> (i32, i32) {
    %c0_i32 = arith.constant 0 : i32
    %c0_i32_0 = arith.constant 0 : i32
    return %arg0, %c0_i32 : i32, i32
  }
  func.func @transform_1(%arg0: i32) -> (i32, i32) {
    %c0_i32 = arith.constant 0 : i32
    %c0_i32_0 = arith.constant 0 : i32
    %c0_i32_1 = arith.constant 0 : i32
    return %c0_i32, %c0_i32_0 : i32, i32
  }
  func.func @transform_2(%arg0: i32) -> (i32, i32) {
    %c0_i32 = arith.constant 0 : i32
    %c0_i32_0 = arith.constant 0 : i32
    %c0_i32_1 = arith.constant 0 : i32
    return %c0_i32, %c0_i32_0 : i32, i32
  }
  func.func @transform_3(%arg0: i32) -> (i32, i32) {
    %c0_i32 = arith.constant 0 : i32
    %c0_i32_0 = arith.constant 0 : i32
    %c0_i32_1 = arith.constant 0 : i32
    return %c0_i32, %c0_i32_0 : i32, i32
  }
  func.func @transform_4(%arg0: i32) -> (i32, i32) {
    %c0_i32 = arith.constant 0 : i32
    %c0_i32_0 = arith.constant 0 : i32
    %c0_i32_1 = arith.constant 0 : i32
    return %c0_i32, %c0_i32_0 : i32, i32
  }
  func.func @transform_5(%arg0: i32) -> (i32, i32) {
    %c0_i32 = arith.constant 0 : i32
    %c0_i32_0 = arith.constant 0 : i32
    return %arg0, %c0_i32 : i32, i32
  }
}

</mosaic_0001>

<llo_original>
// kernel: tpu_custom_call.1
$region0: #{tpu_custom_call.1}
  #allocation0 [shape = 'u32[]', space=smem, size = 0x4, offset = 0x4, fixed_abs, tag = 'smem constant byte address 0x4 - core index']
  #allocation1 [shape = 'u32[144,128]{1,0:T(1,128)}', space=vmem, size = 0x12000, scoped, tag = 'internal scratch']
  %s0 = inlined_call_operand.hbm [shape: f32[8,32], index: 0, kind: input, shape index: {}]
  %s1 = inlined_call_operand.hbm [shape: bf16[32,128], index: 1, kind: input, shape index: {}]
  %s2 = inlined_call_operand.hbm [shape: bf16[128,128], index: 2, kind: input, shape index: {}]
  %s3 = inlined_call_operand.hbm [shape: bf16[128,128], index: 3, kind: input, shape index: {}]
  %s4 = inlined_call_operand.vmem [shape: f32[3,128], index: 4, kind: input, shape index: {}]
  %s5 = inlined_call_operand.hbm [shape: f32[8,8], index: 5, kind: output, shape index: {}]
  %s6 = sld [smem:[#allocation0]]
  $region46: #{tpu_custom_call.1} parent=0
    _
  %s8 = ssub.s32 1, %s6
  %s9 = scalar_select 0, %s8, %s6
  $region1: #{tpu_custom_call.1} parent=0
    #allocation2 [shape = 'u8[4096]{0}', space=vmem, size = 0x1000, scoped, tag = 'input window, operand 0, single buffered']
    #allocation3 [shape = 's32[1]{0}', space=sflag, size = 0x4, scoped, tag = 'scoped memory for tpu_custom_call.1']
    #allocation4 [shape = 's32[1]{0}', space=sflag, size = 0x4, scoped, tag = 'scoped memory for tpu_custom_call.1']
    #allocation5 [shape = 'u8[8192]{0}', space=vmem, size = 0x2000, scoped, tag = 'input window, operand 1, single buffered']
    #allocation6 [shape = 's32[1]{0}', space=sflag, size = 0x4, scoped, tag = 'scoped memory for tpu_custom_call.1']
    #allocation7 [shape = 'u8[32768]{0}', space=vmem, size = 0x8000, scoped, tag = 'input window, operand 2, single buffered']
    #allocation8 [shape = 'u8[32768]{0}', space=vmem, size = 0x8000, scoped, tag = 'input window, operand 3, single buffered']
    #allocation9 [shape = 's32[1]{0}', space=sflag, size = 0x4, scoped, tag = 'scoped memory for tpu_custom_call.1']
    #allocation10 [shape = 'u8[4096]{0}', space=vmem, size = 0x1000, scoped, tag = 'output window, operand 0, single buffered']
    %10 = vsyncpa [#allocation3], 0
    %11 = vsyncpa [#allocation6], 0
    %12 = vsyncpa [#allocation9], 0
    %13 = vsyncpa [#allocation4], 0
    // Predicated region
    $region2: #{tpu_custom_call.1} parent=1 // pred_check
      _
    $region3: #{tpu_custom_call.1} parent=1 // pred_check_branch
      %15 = sbr.rel (0) target = $region5
    $region4: #{tpu_custom_call.1} parent=1 // pred_region
      %s17 = ssub.s32 128, 128
      %18 = vsyncadd [#allocation3], %s17
      %s20 = sshll.u32 [#allocation2], 4
      %s21 = int_to_ptr.vmem [resolvable:$true] %s20
      %23 = dma.hbm_to_vmem [thread:$0]  %s0, 128, %s21, [#allocation3]
    $region5: #{tpu_custom_call.1} parent=1 // pred_fallthru
      _
    // Predicated region
    $region6: #{tpu_custom_call.1} parent=1 // pred_check
      _
    $region7: #{tpu_custom_call.1} parent=1 // pred_check_branch
      %25 = sbr.rel (0) target = $region9
    $region8: #{tpu_custom_call.1} parent=1 // pred_region
      %s27 = ssub.s32 256, 256
      %28 = vsyncadd [#allocation6], %s27
      %s29 = sshll.u32 [#allocation5], 4
      %s30 = int_to_ptr.vmem [resolvable:$true] %s29
      %35 = dma.hbm_to_vmem [thread:$0]  %s1, 256, %s30, [#allocation6], 64, 64, 4
    $region9: #{tpu_custom_call.1} parent=1 // pred_fallthru
      _
    // Predicated region
    $region10: #{tpu_custom_call.1} parent=1 // pred_check
      _
    $region11: #{tpu_custom_call.1} parent=1 // pred_check_branch
      %37 = sbr.rel (0) target = $region13
    $region12: #{tpu_custom_call.1} parent=1 // pred_region
      %s39 = ssub.s32 1024, 1024
      %40 = vsyncadd [#allocation6], %s39
      %s41 = sshll.u32 [#allocation7], 4
      %s42 = int_to_ptr.vmem [resolvable:$true] %s41
      %47 = dma.hbm_to_vmem [thread:$0]  %s2, 1024, %s42, [#allocation6], 64, 64, 4
    $region13: #{tpu_custom_call.1} parent=1 // pred_fallthru
      _
    // Predicated region
    $region14: #{tpu_custom_call.1} parent=1 // pred_check
      _
    $region15: #{tpu_custom_call.1} parent=1 // pred_check_branch
      %49 = sbr.rel (0) target = $region17
    $region16: #{tpu_custom_call.1} parent=1 // pred_region
      %s51 = ssub.s32 1024, 1024
      %52 = vsyncadd [#allocation9], %s51
      %s53 = sshll.u32 [#allocation8], 4
      %s54 = int_to_ptr.vmem [resolvable:$true] %s53
      %59 = dma.hbm_to_vmem [thread:$0]  %s3, 1024, %s54, [#allocation9], 64, 64, 4
    $region17: #{tpu_custom_call.1} parent=1 // pred_fallthru
      _
    // Predicated region
    $region18: #{tpu_custom_call.1} parent=1 // pred_check
      _
    $region19: #{tpu_custom_call.1} parent=1 // pred_check_branch
      %61 = sbr.rel (0) target = $region21
    $region20: #{tpu_custom_call.1} parent=1 // pred_region
      _
    $region21: #{tpu_custom_call.1} parent=1 // pred_fallthru
      _
    // Predicated region
    $region22: #{tpu_custom_call.1} parent=1 // pred_check
      _
    $region23: #{tpu_custom_call.1} parent=1 // pred_check_branch
      %63 = sbr.rel (0) target = $region25
    $region24: #{tpu_custom_call.1} parent=1 // pred_region
      %64 = dma.done [#allocation3], 128
    $region25: #{tpu_custom_call.1} parent=1 // pred_fallthru
      _
    // Predicated region
    $region26: #{tpu_custom_call.1} parent=1 // pred_check
      _
    $region27: #{tpu_custom_call.1} parent=1 // pred_check_branch
      %66 = sbr.rel (0) target = $region29
    $region28: #{tpu_custom_call.1} parent=1 // pred_region
      %67 = dma.done [#allocation6], 256
    $region29: #{tpu_custom_call.1} parent=1 // pred_fallthru
      _
    // Predicated region
    $region30: #{tpu_custom_call.1} parent=1 // pred_check
      _
    $region31: #{tpu_custom_call.1} parent=1 // pred_check_branch
      %69 = sbr.rel (0) target = $region33
    $region32: #{tpu_custom_call.1} parent=1 // pred_region
      %70 = dma.done [#allocation6], 1024
    $region33: #{tpu_custom_call.1} parent=1 // pred_fallthru
      _
    // Predicated region
    $region34: #{tpu_custom_call.1} parent=1 // pred_check
      _
    $region35: #{tpu_custom_call.1} parent=1 // pred_check_branch
      %72 = sbr.rel (0) target = $region37
    $region36: #{tpu_custom_call.1} parent=1 // pred_region
      %73 = dma.done [#allocation9], 1024
    $region37: #{tpu_custom_call.1} parent=1 // pred_fallthru
      _
    %v75 = vld [vmem:[#allocation2] sm:$0xff]
    %v76 = vpack.c.bf16 %v75, %v75
    %v77 = vld [vmem:[#allocation5] sm:$0xf]
    %v78 = vld [vmem:[#allocation5 + $0x4] sm:$0xf]
    %v79 = vld [vmem:[#allocation5 + $0x8] sm:$0xf]
    %v80 = vld [vmem:[#allocation5 + $0xc] sm:$0xf]
    %v81 = vld [vmem:[%s4] sm:$0x1]
    %v82 = vlaneseq
    %v83 = vshrl.u32 %v82, 7
    %v84 = vsub.s32 0, %v83
    %v85 = vrot.slane %v81, %v84
    %v90 = vunpack.c.l.b16 %v77
    %v91 = vunpack.c.l.b16 %v78
    %v92 = vunpack.c.l.b16 %v79
    %v93 = vunpack.c.l.b16 %v80
    %v94 = vpack.c.b16 %v91, %v90
    %v95 = vpack.c.b16 %v93, %v92
    %vm98 = vcmask 261120
    %v100 = vsel %vm98, %v76, 0
    %102 = vmatprep.subr.bf16.mxu0 0
    %103 = vmatpush1.bf16.msra.mxu0 %v94
    %104 = vmatprep.subr.bf16.mxu0 0
    %105 = vmatpush1.bf16.msra.mxu0 %v95
    %106 = vmatprep.subr.bf16.mxu0 0
    %107 = vmatpush1.bf16.msra.mxu0 0
    %108 = vmatprep.subr.bf16.mxu0 0
    %109 = vmatpush1.bf16.msra.mxu0 0
    %110 = vmatprep.subr.bf16.mxu0 0
    %111 = vmatpush1.bf16.msra.mxu0 0
    %112 = vmatprep.subr.bf16.mxu0 0
    %113 = vmatpush1.bf16.msra.mxu0 0
    %114 = vmatprep.subr.bf16.mxu0 0
    %115 = vmatpush1.bf16.msra.mxu0 0
    %116 = vmatprep.subr.bf16.mxu0 0
    %117 = vmatpush1.bf16.msra.mxu0 0
    %118 = vmatprep.subr.bf16.mxu0 0
    %119 = vmatpush1.bf16.msra.mxu0 0
    %120 = vmatprep.subr.bf16.mxu0 0
    %121 = vmatpush1.bf16.msra.mxu0 0
    %122 = vmatprep.subr.bf16.mxu0 0
    %123 = vmatpush1.bf16.msra.mxu0 0
    %124 = vmatprep.subr.bf16.mxu0 0
    %125 = vmatpush1.bf16.msra.mxu0 0
    %126 = vmatprep.subr.bf16.mxu0 0
    %127 = vmatpush1.bf16.msra.mxu0 0
    %128 = vmatprep.subr.bf16.mxu0 0
    %129 = vmatpush1.bf16.msra.mxu0 0
    %130 = vmatprep.subr.bf16.mxu0 0
    %131 = vmatpush1.bf16.msra.mxu0 0
    %132 = vmatprep.subr.bf16.mxu0 0
    %133 = vmatpush1.bf16.msra.mxu0 0
    %134 = vmatprep.mubr.bf16.mxu0 0
    %135 = vmatmul.mubr.bf16.gmra.mrb[0].mxu0 %v100
    %v136 = vpop.f32.mrb[0].mxu0
    %v137 = vadd.f32 %v85, %v136
    %v138 = vpop.f32.mrb[0].mxu0
    %v139 = vpop.f32.mrb[0].mxu0
    %v140 = vpop.f32.mrb[0].mxu0
    %141 = vdwg.mxu0
    %v142 = vmax.f32 %v137, 0.0
    %v143 = vpack.c.bf16 %v142, %v142
    %v144 = vld [vmem:[#allocation7] sm:$0xf]
    %v145 = vld [vmem:[#allocation7 + $0x4] sm:$0xf]
    %v146 = vld [vmem:[#allocation7 + $0x8] sm:$0xf]
    %v147 = vld [vmem:[#allocation7 + $0xc] sm:$0xf]
    %v148 = vld [vmem:[#allocation7 + $0x10] sm:$0xf]
    %v149 = vld [vmem:[#allocation7 + $0x14] sm:$0xf]
    %v150 = vld [vmem:[#allocation7 + $0x18] sm:$0xf]
    %v151 = vld [vmem:[#allocation7 + $0x1c] sm:$0xf]
    %v152 = vld [vmem:[#allocation7 + $0x20] sm:$0xf]
    %v153 = vld [vmem:[#allocation7 + $0x24] sm:$0xf]
    %v154 = vld [vmem:[#allocation7 + $0x28] sm:$0xf]
    %v155 = vld [vmem:[#allocation7 + $0x2c] sm:$0xf]
    %v156 = vld [vmem:[#allocation7 + $0x30] sm:$0xf]
    %v157 = vld [vmem:[#allocation7 + $0x34] sm:$0xf]
    %v158 = vld [vmem:[#allocation7 + $0x38] sm:$0xf]
    %v159 = vld [vmem:[#allocation7 + $0x3c] sm:$0xf]
    %v160 = vld [vmem:[%s4 + $0x1] sm:$0x1]
    %v161 = vlaneseq
    %v162 = vshrl.u32 %v161, 7
    %v163 = vsub.s32 0, %v162
    %v164 = vrot.slane %v160, %v163
    %v181 = vunpack.c.l.b16 %v144
    %v182 = vunpack.c.l.b16 %v145
    %v183 = vunpack.c.l.b16 %v146
    %v184 = vunpack.c.l.b16 %v147
    %v185 = vunpack.c.l.b16 %v148
    %v186 = vunpack.c.l.b16 %v149
    %v187 = vunpack.c.l.b16 %v150
    %v188 = vunpack.c.l.b16 %v151
    %v189 = vunpack.c.l.b16 %v152
    %v190 = vunpack.c.l.b16 %v153
    %v191 = vunpack.c.l.b16 %v154
    %v192 = vunpack.c.l.b16 %v155
    %v193 = vunpack.c.l.b16 %v156
    %v194 = vunpack.c.l.b16 %v157
    %v195 = vunpack.c.l.b16 %v158
    %v196 = vunpack.c.l.b16 %v159
    %v197 = vpack.c.b16 %v182, %v181
    %v198 = vpack.c.b16 %v184, %v183
    %v199 = vpack.c.b16 %v186, %v185
    %v200 = vpack.c.b16 %v188, %v187
    %v201 = vpack.c.b16 %v190, %v189
    %v202 = vpack.c.b16 %v192, %v191
    %v203 = vpack.c.b16 %v194, %v193
    %v204 = vpack.c.b16 %v196, %v195
    %213 = vmatprep.subr.bf16.mxu0 0
    %214 = vmatpush1.bf16.msra.mxu0 %v197
    %215 = vmatprep.subr.bf16.mxu0 0
    %216 = vmatpush1.bf16.msra.mxu0 %v198
    %217 = vmatprep.subr.bf16.mxu0 0
    %218 = vmatpush1.bf16.msra.mxu0 %v199
    %219 = vmatprep.subr.bf16.mxu0 0
    %220 = vmatpush1.bf16.msra.mxu0 %v200
    %221 = vmatprep.subr.bf16.mxu0 0
    %222 = vmatpush1.bf16.msra.mxu0 %v201
    %223 = vmatprep.subr.bf16.mxu0 0
    %224 = vmatpush1.bf16.msra.mxu0 %v202
    %225 = vmatprep.subr.bf16.mxu0 0
    %226 = vmatpush1.bf16.msra.mxu0 %v203
    %227 = vmatprep.subr.bf16.mxu0 0
    %228 = vmatpush1.bf16.msra.mxu0 %v204
    %229 = vmatprep.subr.bf16.mxu0 0
    %230 = vmatpush1.bf16.msra.mxu0 0
    %231 = vmatprep.subr.bf16.mxu0 0
    %232 = vmatpush1.bf16.msra.mxu0 0
    %233 = vmatprep.subr.bf16.mxu0 0
    %234 = vmatpush1.bf16.msra.mxu0 0
    %235 = vmatprep.subr.bf16.mxu0 0
    %236 = vmatpush1.bf16.msra.mxu0 0
    %237 = vmatprep.subr.bf16.mxu0 0
    %238 = vmatpush1.bf16.msra.mxu0 0
    %239 = vmatprep.subr.bf16.mxu0 0
    %240 = vmatpush1.bf16.msra.mxu0 0
    %241 = vmatprep.subr.bf16.mxu0 0
    %242 = vmatpush1.bf16.msra.mxu0 0
    %243 = vmatprep.subr.bf16.mxu0 0
    %244 = vmatpush1.bf16.msra.mxu0 0
    %245 = vmatprep.mubr.bf16.mxu0 0
    %246 = vmatmul.mubr.bf16.gmra.mrb[0].mxu0 %v143
    %v247 = vpop.f32.mrb[0].mxu0
    %v248 = vadd.f32 %v164, %v247
    %v249 = vpop.f32.mrb[0].mxu0
    %v250 = vpop.f32.mrb[0].mxu0
    %v251 = vpop.f32.mrb[0].mxu0
    %252 = vdwg.mxu0
    %v253 = vmax.f32 %v248, 0.0
    %v254 = vpack.c.bf16 %v253, %v253
    %v255 = vld [vmem:[#allocation8] sm:$0xf]
    %v256 = vld [vmem:[#allocation8 + $0x4] sm:$0xf]
    %v257 = vld [vmem:[#allocation8 + $0x8] sm:$0xf]
    %v258 = vld [vmem:[#allocation8 + $0xc] sm:$0xf]
    %v259 = vld [vmem:[#allocation8 + $0x10] sm:$0xf]
    %v260 = vld [vmem:[#allocation8 + $0x14] sm:$0xf]
    %v261 = vld [vmem:[#allocation8 + $0x18] sm:$0xf]
    %v262 = vld [vmem:[#allocation8 + $0x1c] sm:$0xf]
    %v263 = vld [vmem:[#allocation8 + $0x20] sm:$0xf]
    %v264 = vld [vmem:[#allocation8 + $0x24] sm:$0xf]
    %v265 = vld [vmem:[#allocation8 + $0x28] sm:$0xf]
    %v266 = vld [vmem:[#allocation8 + $0x2c] sm:$0xf]
    %v267 = vld [vmem:[#allocation8 + $0x30] sm:$0xf]
    %v268 = vld [vmem:[#allocation8 + $0x34] sm:$0xf]
    %v269 = vld [vmem:[#allocation8 + $0x38] sm:$0xf]
    %v270 = vld [vmem:[#allocation8 + $0x3c] sm:$0xf]
    %v287 = vunpack.c.l.b16 %v255
    %v288 = vunpack.c.l.b16 %v256
    %v289 = vunpack.c.l.b16 %v257
    %v290 = vunpack.c.l.b16 %v258
    %v291 = vunpack.c.l.b16 %v259
    %v292 = vunpack.c.l.b16 %v260
    %v293 = vunpack.c.l.b16 %v261
    %v294 = vunpack.c.l.b16 %v262
    %v295 = vunpack.c.l.b16 %v263
    %v296 = vunpack.c.l.b16 %v264
    %v297 = vunpack.c.l.b16 %v265
    %v298 = vunpack.c.l.b16 %v266
    %v299 = vunpack.c.l.b16 %v267
    %v300 = vunpack.c.l.b16 %v268
    %v301 = vunpack.c.l.b16 %v269
    %v302 = vunpack.c.l.b16 %v270
    %v303 = vpack.c.b16 %v288, %v287
    %v304 = vpack.c.b16 %v290, %v289
    %v305 = vpack.c.b16 %v292, %v291
    %v306 = vpack.c.b16 %v294, %v293
    %v307 = vpack.c.b16 %v296, %v295
    %v308 = vpack.c.b16 %v298, %v297
    %v309 = vpack.c.b16 %v300, %v299
    %v310 = vpack.c.b16 %v302, %v301
    %319 = vmatprep.subr.bf16.mxu0 0
    %320 = vmatpush1.bf16.msra.mxu0 %v303
    %321 = vmatprep.subr.bf16.mxu0 0
    %322 = vmatpush1.bf16.msra.mxu0 %v304
    %323 = vmatprep.subr.bf16.mxu0 0
    %324 = vmatpush1.bf16.msra.mxu0 %v305
    %325 = vmatprep.subr.bf16.mxu0 0
    %326 = vmatpush1.bf16.msra.mxu0 %v306
    %327 = vmatprep.subr.bf16.mxu0 0
    %328 = vmatpush1.bf16.msra.mxu0 %v307
    %329 = vmatprep.subr.bf16.mxu0 0
    %330 = vmatpush1.bf16.msra.mxu0 %v308
    %331 = vmatprep.subr.bf16.mxu0 0
    %332 = vmatpush1.bf16.msra.mxu0 %v309
    %333 = vmatprep.subr.bf16.mxu0 0
    %334 = vmatpush1.bf16.msra.mxu0 %v310
    %335 = vmatprep.subr.bf16.mxu0 0
    %336 = vmatpush1.bf16.msra.mxu0 0
    %337 = vmatprep.subr.bf16.mxu0 0
    %338 = vmatpush1.bf16.msra.mxu0 0
    %339 = vmatprep.subr.bf16.mxu0 0
    %340 = vmatpush1.bf16.msra.mxu0 0
    %341 = vmatprep.subr.bf16.mxu0 0
    %342 = vmatpush1.bf16.msra.mxu0 0
    %343 = vmatprep.subr.bf16.mxu0 0
    %344 = vmatpush1.bf16.msra.mxu0 0
    %345 = vmatprep.subr.bf16.mxu0 0
    %346 = vmatpush1.bf16.msra.mxu0 0
    %347 = vmatprep.subr.bf16.mxu0 0
    %348 = vmatpush1.bf16.msra.mxu0 0
    %349 = vmatprep.subr.bf16.mxu0 0
    %350 = vmatpush1.bf16.msra.mxu0 0
    %351 = vmatprep.mubr.bf16.mxu0 0
    %352 = vmatmul.mubr.bf16.gmra.mrb[0].mxu0 %v254
    %v353 = vpop.f32.mrb[0].mxu0
    %v354 = vadd.f32 0.0, %v353
    %v355 = vpop.f32.mrb[0].mxu0
    %v356 = vpop.f32.mrb[0].mxu0
    %v357 = vpop.f32.mrb[0].mxu0
    %358 = vdwg.mxu0
    %v359 = vld [vmem:[%s4 + $0x2] sm:$0x1]
    %v360 = vlaneseq
    %v361 = vshrl.u32 %v360, 7
    %v362 = vsub.s32 0, %v361
    %v363 = vrot.slane %v359, %v362
    %v364 = vadd.f32 %v354, %v363
    %v365 = vtanh.pop %v364
    %vm366 = vcmask 64512
    %367 = vst.msk [vmem:[#allocation10] sm:$0xff] %vm366, %v365
    // Predicated region
    $region38: #{tpu_custom_call.1} parent=1 // pred_check
      _
    $region39: #{tpu_custom_call.1} parent=1 // pred_check_branch
      %369 = sbr.rel (0) target = $region41
    $region40: #{tpu_custom_call.1} parent=1 // pred_region
      %s371 = ssub.s32 128, 128
      %372 = vsyncadd [#allocation4], %s371
      %s374 = sshll.u32 [#allocation10], 4
      %s375 = int_to_ptr.vmem [resolvable:$true] %s374
      %377 = dma.vmem_to_hbm [thread:$0]  %s375, 128, %s5, [#allocation4]
    $region41: #{tpu_custom_call.1} parent=1 // pred_fallthru
      _
    // Predicated region
    $region42: #{tpu_custom_call.1} parent=1 // pred_check
      _
    $region43: #{tpu_custom_call.1} parent=1 // pred_check_branch
      %379 = sbr.rel (0) target = $region45
    $region44: #{tpu_custom_call.1} parent=1 // pred_region
      %380 = dma.done [#allocation4], 128
    $region45: #{tpu_custom_call.1} parent=1 // pred_fallthru
      _
    %381 = vsyncpa [#allocation3], 1
    %382 = vsyncpa [#allocation6], 1
    %383 = vsyncpa [#allocation9], 1
    %384 = vsyncpa [#allocation4], 1

</llo_original>
